<compile_context>
chip_gen: v6e
topology: v6e:2x2x1
jax: 0.10.0
libtpu: 0.0.40
codegen_flags: <defaults>
</compile_context>

<pallas_src>
import functools

import jax
import jax.numpy as jnp
from jax.experimental import pallas as pl
from jax.experimental.pallas import tpu as pltpu

LRELU_SLOPE = 0.1
KSIZE = 3


def get_padding(kernel_size: int, dilation: int = 1) -> int:
    return int((kernel_size * dilation - dilation) / 2)


def _round_up(x: int, m: int) -> int:
    return ((x + m - 1) // m) * m


def _leaky_relu(x):
    return jnp.where(x >= 0, x, LRELU_SLOPE * x)


def _resblock2_kernel(xl_ref, xm_ref, xr_ref, w1_ref, b1_ref, w2_ref, b2_ref,
                      o_ref, *, dilations, t_orig, t_blk, halo):
    d1, d2 = dilations
    pad1 = get_padding(KSIZE, d1)
    pad2 = get_padding(KSIZE, d2)
    w_mid = t_blk + 2 * pad2                  # width of the intermediate x1 slab

    t_idx = pl.program_id(1)
    t0 = t_idx * t_blk

    # bf16 pieces of the halo'd input window (no f32 full-window cast).
    xm = xm_ref[0]                            # (C, t_blk)
    xl = xl_ref[0][:, 128 - halo:]            # (C, halo) - tail of left lane tile
    xr = xr_ref[0][:, :halo]                  # (C, halo) - head of right lane tile
    # Tile 0 has no real left neighbor: its left halo is the conv's zero padding.
    xl = jnp.where(t_idx > 0, xl, jnp.zeros_like(xl))

    # (C, t_blk + 2*halo) bf16 window covering global cols [t0-halo, t0+t_blk+halo).
    win = jnp.concatenate([xl, xm, xr], axis=1)

    # ---- conv1 (dilation d1): three accumulating per-tap MXU dots ----------
    xt = _leaky_relu(win)                     # bf16 VPU
    y1 = (jnp.dot(w1_ref[0], xt[:, 0 * d1:0 * d1 + w_mid],
                  preferred_element_type=jnp.float32)
          + jnp.dot(w1_ref[1], xt[:, 1 * d1:1 * d1 + w_mid],
                    preferred_element_type=jnp.float32)
          + jnp.dot(w1_ref[2], xt[:, 2 * d1:2 * d1 + w_mid],
                    preferred_element_type=jnp.float32))
    # Residual: only this slice is promoted to f32.
    x_res = win[:, pad1:pad1 + w_mid].astype(jnp.float32)
    x1 = x_res + y1 + b1_ref[...]

    # Zero x1 outside the valid signal range [0, t_orig): reproduces the
    # reference zero "same"-padding of conv2's input at both sequence ends
    # (and at the T-alignment tail padding).
    col = jax.lax.broadcasted_iota(jnp.int32, (1, w_mid), 1)
    gpos = col + (t0 - pad2)
    x1 = jnp.where((gpos >= 0) & (gpos < t_orig), x1, 0.0)

    # ---- conv2 (dilation d2): three accumulating per-tap MXU dots ----------
    x1t = _leaky_relu(x1).astype(jnp.bfloat16)
    y2 = (jnp.dot(w2_ref[0], x1t[:, 0 * d2:0 * d2 + t_blk],
                  preferred_element_type=jnp.float32)
          + jnp.dot(w2_ref[1], x1t[:, 1 * d2:1 * d2 + t_blk],
                    preferred_element_type=jnp.float32)
          + jnp.dot(w2_ref[2], x1t[:, 2 * d2:2 * d2 + t_blk],
                    preferred_element_type=jnp.float32))
    out = x1[:, pad2:pad2 + t_blk] + y2 + b2_ref[...]

    o_ref[0] = out.astype(o_ref.dtype)


def _default_t_block() -> int:
    # v5e (128 MiB VMEM, slow MXU) benefits from 2048-wide tiles; v6e/v7x use
    # 1024 (v7x only has 64 MiB VMEM per TensorCore, so do not go bigger).
    try:
        kind = jax.devices()[0].device_kind.lower()
    except Exception:  # pragma: no cover - defensive
        return 1024
    if "v5 lite" in kind or "v5e" in kind or "v5lite" in kind:
        return 2048
    return 1024


def resblock2(x, w1, b1, w2, b2, dilations=(1, 3), t_block=None):
    """x: (B, C, T); w*: (C_out, C_in, K) PyTorch conv1d weights; b*: (C,)."""
    B, C, T = x.shape
    d1, d2 = dilations
    pad1 = get_padding(KSIZE, d1)
    pad2 = get_padding(KSIZE, d2)
    halo = pad1 + pad2
    assert halo <= 128, "halo must fit in one 128-lane tile"

    if t_block is None:
        t_block = _default_t_block()

    # Lane-dense (multiple-of-128) output tiles along T.
    t_blk = min(_round_up(t_block, 128), _round_up(T, 128))
    t_pad = _round_up(T, t_blk)
    num_t = t_pad // t_blk
    r = t_blk // 128                     # lane tiles per time tile

    # Single zero pad: tail alignment to t_pad plus one extra lane tile so the
    # last time tile has a right-halo lane block to fetch.  bf16 halves input
    # DMA bytes; residual & elementwise math is re-done in f32 in the kernel.
    x_p = jnp.pad(x.astype(jnp.bfloat16),
                  ((0, 0), (0, 0), (0, t_pad - T + 128)))

    # Weights as per-tap (K, C_out, C_in) bf16 matrices; biases (C, 1) f32.
    w1t = jnp.transpose(w1, (2, 0, 1)).astype(jnp.bfloat16)
    w2t = jnp.transpose(w2, (2, 0, 1)).astype(jnp.bfloat16)
    b1c = b1.reshape(C, 1).astype(jnp.float32)
    b2c = b2.reshape(C, 1).astype(jnp.float32)

    kernel = functools.partial(_resblock2_kernel, dilations=dilations,
                               t_orig=T, t_blk=t_blk, halo=halo)

    flops = 2 * 2 * KSIZE * C * C * B * t_pad            # two conv layers
    bytes_accessed = (x_p.size * 2                        # bf16 input stream
                      + B * C * t_pad * 4                 # f32 output
                      + (w1t.size + w2t.size) * 2 + (b1c.size + b2c.size) * 4)

    # 48 MiB is safe on every generation (v7x has 64 MiB/TC); only the v5e
    # 2048-wide tiling needs (and may use) more.
    vmem_limit = 96 * 1024 * 1024 if t_blk >= 2048 else 48 * 1024 * 1024

    out = pl.pallas_call(
        kernel,
        out_shape=jax.ShapeDtypeStruct((B, C, t_pad), x.dtype),
        grid=(B, num_t),
        in_specs=[
            # Left-halo lane tile (clamped to 0 for the first tile; the kernel
            # zeroes it there), main tile, right-halo lane tile: three Blocked
            # views of the SAME padded array -> no window materialization.
            pl.BlockSpec((1, C, 128), lambda b, t: (b, 0, jnp.maximum(t * r - 1, 0))),
            pl.BlockSpec((1, C, t_blk), lambda b, t: (b, 0, t)),
            pl.BlockSpec((1, C, 128), lambda b, t: (b, 0, (t + 1) * r)),
            # Constant-index weight/bias blocks (fetched once, reused).
            pl.BlockSpec((KSIZE, C, C), lambda b, t: (0, 0, 0)),
            pl.BlockSpec((C, 1), lambda b, t: (0, 0)),
            pl.BlockSpec((KSIZE, C, C), lambda b, t: (0, 0, 0)),
            pl.BlockSpec((C, 1), lambda b, t: (0, 0)),
        ],
        out_specs=pl.BlockSpec((1, C, t_blk), lambda b, t: (b, 0, t)),
        compiler_params=pltpu.CompilerParams(
            dimension_semantics=("parallel", "parallel"),
            vmem_limit_bytes=vmem_limit),
        cost_estimate=pl.CostEstimate(
            flops=flops, transcendentals=0, bytes_accessed=bytes_accessed),
    )(x_p, x_p, x_p, w1t, b1c, w2t, b2c)

    return out[:, :, :T]


def _weight_norm(v, g):
    # PyTorch weight_norm (dim=0): w = g * v / ||v||, norm over (in, k) per out-channel.
    norm = jnp.sqrt(jnp.sum(v * v, axis=(1, 2), keepdims=True))
    return g.reshape(-1, 1, 1) * v / norm


def _reference(x, w1, b1, w2, b2, dilations=(1, 3)):
    # Pure-JAX f32 reference using lax.conv_general_dilated (NCT / OIK).
    def conv(xin, w, b, d):
        pad = get_padding(KSIZE, d)
        y = jax.lax.conv_general_dilated(
            xin, w, window_strides=(1,), padding=[(pad, pad)],
            rhs_dilation=(d,), dimension_numbers=("NCH", "OIH", "NCH"))
        return y + b.reshape(1, -1, 1)

    out = x
    for w, b, d in ((w1, b1, dilations[0]), (w2, b2, dilations[1])):
        xt = jnp.where(out >= 0, out, LRELU_SLOPE * out)
        out = conv(xt, w, b, d) + out
    return out


if __name__ == "__main__":
    # Small shapes; T deliberately not a multiple of 128 and t_block=128 so the
    # test exercises multiple time tiles, the clamped/zeroed left halo, the
    # right halo lane tile and the tail padding.
    B, C, T = 2, 8, 300
    key = jax.random.PRNGKey(0)
    kx, kv1, kg1, kb1, kv2, kg2, kb2 = jax.random.split(key, 7)

    x = jax.random.normal(kx, (B, C, T), dtype=jnp.float32)

    # Deterministic synthetic parameters (weight_norm parametrization: v, g, bias).
    v1 = jax.random.normal(kv1, (C, C, KSIZE), dtype=jnp.float32) * 0.3
    g1 = jax.random.uniform(kg1, (C,), dtype=jnp.float32, minval=0.5, maxval=1.5)
    b1 = jax.random.normal(kb1, (C,), dtype=jnp.float32) * 0.1
    v2 = jax.random.normal(kv2, (C, C, KSIZE), dtype=jnp.float32) * 0.3
    g2 = jax.random.uniform(kg2, (C,), dtype=jnp.float32, minval=0.5, maxval=1.5)
    b2 = jax.random.normal(kb2, (C,), dtype=jnp.float32) * 0.1

    w1 = _weight_norm(v1, g1)
    w2 = _weight_norm(v2, g2)

    out = resblock2(x, w1, b1, w2, b2, dilations=(1, 3), t_block=128)
    out = jax.block_until_ready(out)

    ref = _reference(x, w1, b1, w2, b2, dilations=(1, 3))
    assert out.shape == (B, C, T)
    # bf16 MXU operands / bf16 input stream (f32 accumulation) => slightly
    # looser tolerance vs the f32 reference.
    err = float(jnp.max(jnp.abs(out - ref)))
    assert jnp.allclose(out, ref, atol=5e-2, rtol=5e-2), err

    print("KERNEL_OK")
</pallas_src>

<mosaic_0001>
module attributes {stable_mosaic.version = 11 : i64} {
  func.func @_resblock2_kernel(%arg0: i32, %arg1: i32, %arg2: memref<1x8x128xbf16, #tpu.memory_space<vmem>>, %arg3: memref<1x8x128xbf16, #tpu.memory_space<vmem>>, %arg4: memref<1x8x128xbf16, #tpu.memory_space<vmem>>, %arg5: memref<3x8x8xbf16, #tpu.memory_space<vmem>>, %arg6: memref<8x1xf32, #tpu.memory_space<vmem>>, %arg7: memref<3x8x8xbf16, #tpu.memory_space<vmem>>, %arg8: memref<8x1xf32, #tpu.memory_space<vmem>>, %arg9: memref<1x8x128xf32, #tpu.memory_space<vmem>>) attributes {dimension_semantics = [#tpu.dimension_semantics<parallel>, #tpu.dimension_semantics<parallel>], iteration_bounds = array<i64: 2, 3>, scalar_prefetch = 0 : i64, scratch_operands = 0 : i64, tpu.core_type = #tpu.core_type<tc>, window_params = [{transform_indices = @transform_0, window_bounds = array<i64: 1, 8, 128>}, {transform_indices = @transform_1, window_bounds = array<i64: 1, 8, 128>}, {transform_indices = @transform_2, window_bounds = array<i64: 1, 8, 128>}, {pipeline_mode = #tpu.pipeline_mode<synchronous>, transform_indices = @transform_3, window_bounds = array<i64: 3, 8, 8>}, {pipeline_mode = #tpu.pipeline_mode<synchronous>, transform_indices = @transform_4, window_bounds = array<i64: 8, 1>}, {pipeline_mode = #tpu.pipeline_mode<synchronous>, transform_indices = @transform_5, window_bounds = array<i64: 3, 8, 8>}, {pipeline_mode = #tpu.pipeline_mode<synchronous>, transform_indices = @transform_6, window_bounds = array<i64: 8, 1>}, {transform_indices = @transform_7, window_bounds = array<i64: 1, 8, 128>}]} {
    %c128_i32 = arith.constant 128 : i32
    %0 = arith.muli %arg1, %c128_i32 : i32
    %c0 = arith.constant 0 : index
    %c0_0 = arith.constant 0 : index
    %c0_1 = arith.constant 0 : index
    %1 = vector.load %arg3[%c0, %c0_0, %c0_1] : memref<1x8x128xbf16, #tpu.memory_space<vmem>>, vector<1x8x128xbf16>
    %2 = vector.shape_cast %1 : vector<1x8x128xbf16> to vector<8x128xbf16>
    %c0_2 = arith.constant 0 : index
    %c0_3 = arith.constant 0 : index
    %c0_4 = arith.constant 0 : index
    %3 = vector.load %arg2[%c0_2, %c0_3, %c0_4] : memref<1x8x128xbf16, #tpu.memory_space<vmem>>, vector<1x8x128xbf16>
    %4 = vector.shape_cast %3 : vector<1x8x128xbf16> to vector<8x128xbf16>
    %5 = vector.extract_strided_slice %4 {offsets = [0, 124], sizes = [8, 4], strides = [1, 1]} : vector<8x128xbf16> to vector<8x4xbf16>
    %c0_5 = arith.constant 0 : index
    %c0_6 = arith.constant 0 : index
    %c0_7 = arith.constant 0 : index
    %6 = vector.load %arg4[%c0_5, %c0_6, %c0_7] : memref<1x8x128xbf16, #tpu.memory_space<vmem>>, vector<1x8x128xbf16>
    %7 = vector.shape_cast %6 : vector<1x8x128xbf16> to vector<8x128xbf16>
    %8 = vector.extract_strided_slice %7 {offsets = [0, 0], sizes = [8, 4], strides = [1, 1]} : vector<8x128xbf16> to vector<8x4xbf16>
    %c0_i32 = arith.constant 0 : i32
    %9 = arith.cmpi sgt, %arg1, %c0_i32 : i32
    %cst = arith.constant 0.000000e+00 : bf16
    %10 = vector.broadcast %cst : bf16 to vector<8x4xbf16>
    %11 = arith.select %9, %5, %10 : vector<8x4xbf16>
    %12 = tpu.concatenate %11, %2, %8 in 1 : vector<8x4xbf16>, vector<8x128xbf16>, vector<8x4xbf16> -> vector<8x136xbf16>
    %cst_8 = arith.constant 0.000000e+00 : bf16
    %13 = vector.broadcast %cst_8 : bf16 to vector<8x136xbf16>
    %14 = arith.cmpf oge, %12, %13 : vector<8x136xbf16>
    %cst_9 = arith.constant 1.000980e-01 : bf16
    %15 = vector.broadcast %cst_9 : bf16 to vector<8x136xbf16>
    %16 = arith.mulf %15, %12 : vector<8x136xbf16>
    %17 = arith.select %14, %12, %16 : vector<8x136xi1>, vector<8x136xbf16>
    %c0_10 = arith.constant 0 : index
    %c0_11 = arith.constant 0 : index
    %c0_12 = arith.constant 0 : index
    %18 = vector.load %arg5[%c0_10, %c0_11, %c0_12] : memref<3x8x8xbf16, #tpu.memory_space<vmem>>, vector<1x8x8xbf16>
    %19 = vector.shape_cast %18 : vector<1x8x8xbf16> to vector<8x8xbf16>
    %20 = vector.extract_strided_slice %17 {offsets = [0, 0], sizes = [8, 134], strides = [1, 1]} : vector<8x136xbf16> to vector<8x134xbf16>
    %cst_13 = arith.constant dense<0.000000e+00> : vector<8x134xf32>
    %21 = tpu.matmul %19, %20, %cst_13 {dimension_numbers = #tpu.dot_dimension_numbers<[1], [0], [0], [1], [0, 0, 1, 1], [], []>} : vector<8x8xbf16>, vector<8x134xbf16>, vector<8x134xf32> -> vector<8x134xf32>
    %c1 = arith.constant 1 : index
    %c0_14 = arith.constant 0 : index
    %c0_15 = arith.constant 0 : index
    %22 = vector.load %arg5[%c1, %c0_14, %c0_15] : memref<3x8x8xbf16, #tpu.memory_space<vmem>>, vector<1x8x8xbf16>
    %23 = vector.shape_cast %22 : vector<1x8x8xbf16> to vector<8x8xbf16>
    %24 = vector.extract_strided_slice %17 {offsets = [0, 1], sizes = [8, 134], strides = [1, 1]} : vector<8x136xbf16> to vector<8x134xbf16>
    %cst_16 = arith.constant dense<0.000000e+00> : vector<8x134xf32>
    %25 = tpu.matmul %23, %24, %cst_16 {dimension_numbers = #tpu.dot_dimension_numbers<[1], [0], [0], [1], [0, 0, 1, 1], [], []>} : vector<8x8xbf16>, vector<8x134xbf16>, vector<8x134xf32> -> vector<8x134xf32>
    %26 = arith.addf %21, %25 : vector<8x134xf32>
    %c2 = arith.constant 2 : index
    %c0_17 = arith.constant 0 : index
    %c0_18 = arith.constant 0 : index
    %27 = vector.load %arg5[%c2, %c0_17, %c0_18] : memref<3x8x8xbf16, #tpu.memory_space<vmem>>, vector<1x8x8xbf16>
    %28 = vector.shape_cast %27 : vector<1x8x8xbf16> to vector<8x8xbf16>
    %29 = vector.extract_strided_slice %17 {offsets = [0, 2], sizes = [8, 134], strides = [1, 1]} : vector<8x136xbf16> to vector<8x134xbf16>
    %cst_19 = arith.constant dense<0.000000e+00> : vector<8x134xf32>
    %30 = tpu.matmul %28, %29, %cst_19 {dimension_numbers = #tpu.dot_dimension_numbers<[1], [0], [0], [1], [0, 0, 1, 1], [], []>} : vector<8x8xbf16>, vector<8x134xbf16>, vector<8x134xf32> -> vector<8x134xf32>
    %31 = arith.addf %26, %30 : vector<8x134xf32>
    %32 = vector.extract_strided_slice %12 {offsets = [0, 1], sizes = [8, 134], strides = [1, 1]} : vector<8x136xbf16> to vector<8x134xbf16>
    %33 = arith.extf %32 : vector<8x134xbf16> to vector<8x134xf32>
    %34 = arith.addf %33, %31 : vector<8x134xf32>
    %c0_20 = arith.constant 0 : index
    %c0_21 = arith.constant 0 : index
    %35 = vector.load %arg6[%c0_20, %c0_21] : memref<8x1xf32, #tpu.memory_space<vmem>>, vector<8x1xf32>
    %36 = vector.broadcast %35 : vector<8x1xf32> to vector<8x134xf32>
    %37 = arith.addf %34, %36 : vector<8x134xf32>
    %38 = tpu.iota {dimensions = array<i32: 1>} : vector<1x134xi32>
    %c3_i32 = arith.constant 3 : i32
    %39 = arith.subi %0, %c3_i32 : i32
    %40 = vector.broadcast %39 : i32 to vector<1x134xi32>
    %41 = arith.addi %38, %40 : vector<1x134xi32>
    %c0_i32_22 = arith.constant 0 : i32
    %42 = vector.broadcast %c0_i32_22 : i32 to vector<1x134xi32>
    %43 = arith.cmpi sge, %41, %42 : vector<1x134xi32>
    %c300_i32 = arith.constant 300 : i32
    %44 = vector.broadcast %c300_i32 : i32 to vector<1x134xi32>
    %45 = arith.cmpi slt, %41, %44 : vector<1x134xi32>
    %46 = arith.andi %43, %45 : vector<1x134xi1>
    %cst_23 = arith.constant 0.000000e+00 : f32
    %47 = vector.shape_cast %46 : vector<1x134xi1> to vector<1x134xi1>
    %48 = vector.broadcast %47 : vector<1x134xi1> to vector<8x134xi1>
    %49 = vector.broadcast %cst_23 : f32 to vector<8x134xf32>
    %50 = arith.select %48, %37, %49 : vector<8x134xi1>, vector<8x134xf32>
    %cst_24 = arith.constant 0.000000e+00 : f32
    %51 = vector.broadcast %cst_24 : f32 to vector<8x134xf32>
    %52 = arith.cmpf oge, %50, %51 : vector<8x134xf32>
    %cst_25 = arith.constant 1.000000e-01 : f32
    %53 = vector.broadcast %cst_25 : f32 to vector<8x134xf32>
    %54 = arith.mulf %53, %50 : vector<8x134xf32>
    %55 = arith.select %52, %50, %54 : vector<8x134xi1>, vector<8x134xf32>
    %56 = arith.truncf %55 : vector<8x134xf32> to vector<8x134xbf16>
    %c0_26 = arith.constant 0 : index
    %c0_27 = arith.constant 0 : index
    %c0_28 = arith.constant 0 : index
    %57 = vector.load %arg7[%c0_26, %c0_27, %c0_28] : memref<3x8x8xbf16, #tpu.memory_space<vmem>>, vector<1x8x8xbf16>
    %58 = vector.shape_cast %57 : vector<1x8x8xbf16> to vector<8x8xbf16>
    %59 = vector.extract_strided_slice %56 {offsets = [0, 0], sizes = [8, 128], strides = [1, 1]} : vector<8x134xbf16> to vector<8x128xbf16>
    %cst_29 = arith.constant dense<0.000000e+00> : vector<8x128xf32>
    %60 = tpu.matmul %58, %59, %cst_29 {dimension_numbers = #tpu.dot_dimension_numbers<[1], [0], [0], [1], [0, 0, 1, 1], [], []>} : vector<8x8xbf16>, vector<8x128xbf16>, vector<8x128xf32> -> vector<8x128xf32>
    %c1_30 = arith.constant 1 : index
    %c0_31 = arith.constant 0 : index
    %c0_32 = arith.constant 0 : index
    %61 = vector.load %arg7[%c1_30, %c0_31, %c0_32] : memref<3x8x8xbf16, #tpu.memory_space<vmem>>, vector<1x8x8xbf16>
    %62 = vector.shape_cast %61 : vector<1x8x8xbf16> to vector<8x8xbf16>
    %63 = vector.extract_strided_slice %56 {offsets = [0, 3], sizes = [8, 128], strides = [1, 1]} : vector<8x134xbf16> to vector<8x128xbf16>
    %cst_33 = arith.constant dense<0.000000e+00> : vector<8x128xf32>
    %64 = tpu.matmul %62, %63, %cst_33 {dimension_numbers = #tpu.dot_dimension_numbers<[1], [0], [0], [1], [0, 0, 1, 1], [], []>} : vector<8x8xbf16>, vector<8x128xbf16>, vector<8x128xf32> -> vector<8x128xf32>
    %65 = arith.addf %60, %64 : vector<8x128xf32>
    %c2_34 = arith.constant 2 : index
    %c0_35 = arith.constant 0 : index
    %c0_36 = arith.constant 0 : index
    %66 = vector.load %arg7[%c2_34, %c0_35, %c0_36] : memref<3x8x8xbf16, #tpu.memory_space<vmem>>, vector<1x8x8xbf16>
    %67 = vector.shape_cast %66 : vector<1x8x8xbf16> to vector<8x8xbf16>
    %68 = vector.extract_strided_slice %56 {offsets = [0, 6], sizes = [8, 128], strides = [1, 1]} : vector<8x134xbf16> to vector<8x128xbf16>
    %cst_37 = arith.constant dense<0.000000e+00> : vector<8x128xf32>
    %69 = tpu.matmul %67, %68, %cst_37 {dimension_numbers = #tpu.dot_dimension_numbers<[1], [0], [0], [1], [0, 0, 1, 1], [], []>} : vector<8x8xbf16>, vector<8x128xbf16>, vector<8x128xf32> -> vector<8x128xf32>
    %70 = arith.addf %65, %69 : vector<8x128xf32>
    %71 = vector.extract_strided_slice %50 {offsets = [0, 3], sizes = [8, 128], strides = [1, 1]} : vector<8x134xf32> to vector<8x128xf32>
    %72 = arith.addf %71, %70 : vector<8x128xf32>
    %c0_38 = arith.constant 0 : index
    %c0_39 = arith.constant 0 : index
    %73 = vector.load %arg8[%c0_38, %c0_39] : memref<8x1xf32, #tpu.memory_space<vmem>>, vector<8x1xf32>
    %74 = vector.broadcast %73 : vector<8x1xf32> to vector<8x128xf32>
    %75 = arith.addf %72, %74 : vector<8x128xf32>
    %c0_40 = arith.constant 0 : index
    %c0_41 = arith.constant 0 : index
    %c0_42 = arith.constant 0 : index
    %76 = vector.load %arg9[%c0_40, %c0_41, %c0_42] : memref<1x8x128xf32, #tpu.memory_space<vmem>>, vector<1x8x128xf32>
    %77 = vector.shape_cast %76 : vector<1x8x128xf32> to vector<8x128xf32>
    %78 = vector.shape_cast %75 : vector<8x128xf32> to vector<1x8x128xf32>
    tpu.vector_store %arg9[%c0_40, %c0_41, %c0_42], %78 {strides = array<i32>} : memref<1x8x128xf32, #tpu.memory_space<vmem>>, vector<1x8x128xf32>,
    return
  }
  func.func @transform_0(%arg0: i32, %arg1: i32) -> (i32, i32, i32) {
    %c1_i32 = arith.constant 1 : i32
    %0 = arith.muli %arg1, %c1_i32 : i32
    %c1_i32_0 = arith.constant 1 : i32
    %1 = arith.subi %0, %c1_i32_0 : i32
    %c0_i32 = arith.constant 0 : i32
    %2 = arith.maxsi %1, %c0_i32 : i32
    %c0_i32_1 = arith.constant 0 : i32
    %c0_i32_2 = arith.constant 0 : i32
    return %arg0, %c0_i32_1, %2 : i32, i32, i32
  }
  func.func @transform_1(%arg0: i32, %arg1: i32) -> (i32, i32, i32) {
    %c0_i32 = arith.constant 0 : i32
    %c0_i32_0 = arith.constant 0 : i32
    return %arg0, %c0_i32, %arg1 : i32, i32, i32
  }
  func.func @transform_2(%arg0: i32, %arg1: i32) -> (i32, i32, i32) {
    %c1_i32 = arith.constant 1 : i32
    %0 = arith.addi %arg1, %c1_i32 : i32
    %c1_i32_0 = arith.constant 1 : i32
    %1 = arith.muli %0, %c1_i32_0 : i32
    %c0_i32 = arith.constant 0 : i32
    %c0_i32_1 = arith.constant 0 : i32
    return %arg0, %c0_i32, %1 : i32, i32, i32
  }
  func.func @transform_3(%arg0: i32, %arg1: i32) -> (i32, i32, i32) {
    %c0_i32 = arith.constant 0 : i32
    %c0_i32_0 = arith.constant 0 : i32
    %c0_i32_1 = arith.constant 0 : i32
    %c0_i32_2 = arith.constant 0 : i32
    return %c0_i32, %c0_i32_0, %c0_i32_1 : i32, i32, i32
  }
  func.func @transform_4(%arg0: i32, %arg1: i32) -> (i32, i32) {
    %c0_i32 = arith.constant 0 : i32
    %c0_i32_0 = arith.constant 0 : i32
    %c0_i32_1 = arith.constant 0 : i32
    return %c0_i32, %c0_i32_0 : i32, i32
  }
  func.func @transform_5(%arg0: i32, %arg1: i32) -> (i32, i32, i32) {
    %c0_i32 = arith.constant 0 : i32
    %c0_i32_0 = arith.constant 0 : i32
    %c0_i32_1 = arith.constant 0 : i32
    %c0_i32_2 = arith.constant 0 : i32
    return %c0_i32, %c0_i32_0, %c0_i32_1 : i32, i32, i32
  }
  func.func @transform_6(%arg0: i32, %arg1: i32) -> (i32, i32) {
    %c0_i32 = arith.constant 0 : i32
    %c0_i32_0 = arith.constant 0 : i32
    %c0_i32_1 = arith.constant 0 : i32
    return %c0_i32, %c0_i32_0 : i32, i32
  }
  func.func @transform_7(%arg0: i32, %arg1: i32) -> (i32, i32, i32) {
    %c0_i32 = arith.constant 0 : i32
    %c0_i32_0 = arith.constant 0 : i32
    return %arg0, %c0_i32, %arg1 : i32, i32, i32
  }
}

</mosaic_0001>

<llo_original>
// kernel: tpu_custom_call.1
$region0: #{tpu_custom_call.1}
  #allocation0 [shape = 'u32[]', space=smem, size = 0x4, offset = 0x4, fixed_abs, tag = 'smem constant byte address 0x4 - core index']
  #allocation1 [shape = 'u32[144,128]{1,0:T(1,128)}', space=vmem, size = 0x12000, scoped, tag = 'internal scratch']
  %s0 = inlined_call_operand.hbm [shape: bf16[2,8,512], index: 0, kind: input, shape index: {}]
  %s1 = inlined_call_operand.hbm [shape: bf16[2,8,512], index: 1, kind: input, shape index: {}]
  %s2 = inlined_call_operand.hbm [shape: bf16[2,8,512], index: 2, kind: input, shape index: {}]
  %s3 = inlined_call_operand.vmem [shape: bf16[3,8,8], index: 3, kind: input, shape index: {}]
  %s4 = inlined_call_operand.vmem [shape: f32[8,1], index: 4, kind: input, shape index: {}]
  %s5 = inlined_call_operand.vmem [shape: bf16[3,8,8], index: 5, kind: input, shape index: {}]
  %s6 = inlined_call_operand.vmem [shape: f32[8,1], index: 6, kind: input, shape index: {}]
  %s7 = inlined_call_operand.hbm [shape: f32[2,8,384], index: 7, kind: output, shape index: {}]
  %s8 = sld [smem:[#allocation0]]
  $region73: #{tpu_custom_call.1} parent=0
    _
  %s10 = ssub.s32 1, %s8
  %s11 = scalar_select 0, %s10, %s8
  $region1: #{tpu_custom_call.1} parent=0
    #allocation2 [shape = 'u8[4096]{0}', space=vmem, size = 0x1000, scoped, tag = 'input window, operand 0']
    #allocation3 [shape = 's32[2]{0}', space=sflag, size = 0x8, scoped, tag = 'scoped memory for tpu_custom_call.1']
    #allocation4 [shape = 's32[2]{0}', space=sflag, size = 0x8, scoped, tag = 'scoped memory for tpu_custom_call.1']
    #allocation5 [shape = 'u8[4096]{0}', space=vmem, size = 0x1000, scoped, tag = 'input window, operand 1']
    #allocation6 [shape = 's32[2]{0}', space=sflag, size = 0x8, scoped, tag = 'scoped memory for tpu_custom_call.1']
    #allocation7 [shape = 'u8[4096]{0}', space=vmem, size = 0x1000, scoped, tag = 'input window, operand 2']
    #allocation8 [shape = 'u8[8192]{0}', space=vmem, size = 0x2000, scoped, tag = 'output window, operand 0']
    %12 = vsyncpa [#allocation3], 0
    %s13 = scalar_lea.sflag [#allocation3], 1
    %14 = vsyncpa %s13, 0
    %15 = vsyncpa [#allocation6], 0
    %s16 = scalar_lea.sflag [#allocation6], 1
    %17 = vsyncpa %s16, 0
    %18 = vsyncpa [#allocation4], 0
    %s19 = scalar_lea.sflag [#allocation4], 1
    %20 = vsyncpa %s19, 0
    loop: start=0, step=1, limit=8
    $region2: #{tpu_custom_call.1} parent=1 // loop_pre_header
      _
    $region3: #{tpu_custom_call.1} parent=1 // loop_header
      %s22 = sphi 0, %s26
      %p23 = scmp.ge.s32.totalorder %s22, 8
      %s29 = sphi 0, %s41
      %s30 = sphi 0, %s37
      %s31 = sphi 0, %s29
      %s32 = sphi 0, %s30
      %s33 = sphi 0, %s31
      %s34 = sphi 0, %s32
      %s52 = sphi 0, %s54
      %s55 = sphi 0, %s52
      %s56 = sphi 0, %s55
      %s72 = sphi 0, %s56
      %s80 = sphi 0, %s82
      %s83 = sphi 0, %s80
      %s84 = sphi 0, %s83
      %s100 = sphi 0, %s84
      %s110 = sphi 0, %s112
      %s113 = sphi 0, %s110
      %s114 = sphi 0, %s113
      %s130 = sphi 0, %s114
      %s134 = sphi 0, %s134
      %s136 = sphi 0, %s134
      %s137 = sphi 0, %s136
      %s151 = sphi 0, %s137
      %s155 = sphi 0, %s155
      %s157 = sphi 0, %s155
      %s158 = sphi 0, %s157
      %s172 = sphi 0, %s158
      %s176 = sphi 0, %s176
      %s178 = sphi 0, %s176
      %s179 = sphi 0, %s178
      %s193 = sphi 0, %s179
      %s197 = sphi 0, %s197
      %s199 = sphi 0, %s197
      %s200 = sphi 0, %s199
      %s214 = sphi 0, %s200
      %s222 = sphi 0, %s224
      %s225 = sphi 0, %s222
      %s226 = sphi 0, %s225
      %s242 = sphi 0, %s226
    $region4: #{tpu_custom_call.1} parent=1 // loop_header_branch
      %25 = sbr.rel (%p23) target = $region8
    $region5: #{tpu_custom_call.1} parent=1 // loop_body
      %s27 = ssub.s32 %s22, 1
      %s28 = ssub.s32 %s22, 2
      %s35 = sadd.s32 1, %s30
      %p36 = scmp.ge.s32.totalorder %s35, 3
      %s37 = scalar_select %p36, 0, %s35
      %s38 = sadd.s32 1, %s29
      %s39 = scalar_select %p36, %s38, %s29
      %p40 = scmp.ge.s32.totalorder %s39, 2
      %s41 = scalar_select %p40, 0, %s39
      %s42 = ssub.s32 %s30, 1
      %p43 = scmp.gt.s32.totalorder %s42, 0
      %s44 = scalar_select %p43, %s42, 0
      %s45 = ssub.s32 %s37, 1
      %p46 = scmp.gt.s32.totalorder %s45, 0
      %s47 = scalar_select %p46, %s45, 0
      %s48 = ssub.s32 %s29, %s41
      %s49 = ssub.s32 %s44, %s47
      %s50 = sor.u32 %s48, %s49
      %p51 = scmp.eq.s32.totalorder %s50, 0
      %s53 = sadd.s32 %s52, 1
      %s54 = scalar_select %p51, %s52, %s53
      %p57 = pneg %p51
      %p58 = scmp.eq.s32.totalorder %s22, 5
      %p59 = por %p57, %p58
      %p60 = scmp.ne.s32.totalorder %s52, %s55
      %p61 = scmp.eq.s32.totalorder %s22, 0
      %p62 = por %p60, %p61
      %p63 = scmp.ne.s32.totalorder %s52, %s55
      %p64 = scmp.eq.s32.totalorder %s27, 5
      %p65 = por %p63, %p64
      %p66 = scmp.ne.s32.totalorder %s55, %s56
      %p67 = scmp.eq.s32.totalorder %s27, 0
      %p68 = por %p66, %p67
      %p69 = scmp.ne.s32.totalorder %s55, %s56
      %p70 = scmp.eq.s32.totalorder %s28, 5
      %p71 = por %p69, %p70
      %p73 = scmp.ne.s32.totalorder %s56, %s72
      %p74 = scmp.eq.s32.totalorder %s28, 0
      %p75 = por %p73, %p74
      %s76 = ssub.s32 %s29, %s41
      %s77 = ssub.s32 %s30, %s37
      %s78 = sor.u32 %s76, %s77
      %p79 = scmp.eq.s32.totalorder %s78, 0
      %s81 = sadd.s32 %s80, 1
      %s82 = scalar_select %p79, %s80, %s81
      %p85 = pneg %p79
      %p86 = scmp.eq.s32.totalorder %s22, 5
      %p87 = por %p85, %p86
      %p88 = scmp.ne.s32.totalorder %s80, %s83
      %p89 = scmp.eq.s32.totalorder %s22, 0
      %p90 = por %p88, %p89
      %p91 = scmp.ne.s32.totalorder %s80, %s83
      %p92 = scmp.eq.s32.totalorder %s27, 5
      %p93 = por %p91, %p92
      %p94 = scmp.ne.s32.totalorder %s83, %s84
      %p95 = scmp.eq.s32.totalorder %s27, 0
      %p96 = por %p94, %p95
      %p97 = scmp.ne.s32.totalorder %s83, %s84
      %p98 = scmp.eq.s32.totalorder %s28, 5
      %p99 = por %p97, %p98
      %p101 = scmp.ne.s32.totalorder %s84, %s100
      %p102 = scmp.eq.s32.totalorder %s28, 0
      %p103 = por %p101, %p102
      %s104 = sadd.s32 %s30, 1
      %s105 = sadd.s32 %s37, 1
      %s106 = ssub.s32 %s29, %s41
      %s107 = ssub.s32 %s104, %s105
      %s108 = sor.u32 %s106, %s107
      %p109 = scmp.eq.s32.totalorder %s108, 0
      %s111 = sadd.s32 %s110, 1
      %s112 = scalar_select %p109, %s110, %s111
      %p115 = pneg %p109
      %p116 = scmp.eq.s32.totalorder %s22, 5
      %p117 = por %p115, %p116
      %p118 = scmp.ne.s32.totalorder %s110, %s113
      %p119 = scmp.eq.s32.totalorder %s22, 0
      %p120 = por %p118, %p119
      %p121 = scmp.ne.s32.totalorder %s110, %s113
      %p122 = scmp.eq.s32.totalorder %s27, 5
      %p123 = por %p121, %p122
      %p124 = scmp.ne.s32.totalorder %s113, %s114
      %p125 = scmp.eq.s32.totalorder %s27, 0
      %p126 = por %p124, %p125
      %p127 = scmp.ne.s32.totalorder %s113, %s114
      %p128 = scmp.eq.s32.totalorder %s28, 5
      %p129 = por %p127, %p128
      %p131 = scmp.ne.s32.totalorder %s114, %s130
      %p132 = scmp.eq.s32.totalorder %s28, 0
      %p133 = por %p131, %p132
      %s135 = sadd.s32 %s134, 1
      %p138 = scmp.eq.s32.totalorder %s22, 5
      %p139 = scmp.ne.s32.totalorder %s134, %s136
      %p140 = scmp.eq.s32.totalorder %s22, 0
      %p141 = por %p139, %p140
      %p142 = scmp.ne.s32.totalorder %s134, %s136
      %p143 = scmp.eq.s32.totalorder %s27, 5
      %p144 = por %p142, %p143
      %p145 = scmp.ne.s32.totalorder %s136, %s137
      %p146 = scmp.eq.s32.totalorder %s27, 0
      %p147 = por %p145, %p146
      %p148 = scmp.ne.s32.totalorder %s136, %s137
      %p149 = scmp.eq.s32.totalorder %s28, 5
      %p150 = por %p148, %p149
      %p152 = scmp.ne.s32.totalorder %s137, %s151
      %p153 = scmp.eq.s32.totalorder %s28, 0
      %p154 = por %p152, %p153
      %s156 = sadd.s32 %s155, 1
      %p159 = scmp.eq.s32.totalorder %s22, 5
      %p160 = scmp.ne.s32.totalorder %s155, %s157
      %p161 = scmp.eq.s32.totalorder %s22, 0
      %p162 = por %p160, %p161
      %p163 = scmp.ne.s32.totalorder %s155, %s157
      %p164 = scmp.eq.s32.totalorder %s27, 5
      %p165 = por %p163, %p164
      %p166 = scmp.ne.s32.totalorder %s157, %s158
      %p167 = scmp.eq.s32.totalorder %s27, 0
      %p168 = por %p166, %p167
      %p169 = scmp.ne.s32.totalorder %s157, %s158
      %p170 = scmp.eq.s32.totalorder %s28, 5
      %p171 = por %p169, %p170
      %p173 = scmp.ne.s32.totalorder %s158, %s172
      %p174 = scmp.eq.s32.totalorder %s28, 0
      %p175 = por %p173, %p174
      %s177 = sadd.s32 %s176, 1
      %p180 = scmp.eq.s32.totalorder %s22, 5
      %p181 = scmp.ne.s32.totalorder %s176, %s178
      %p182 = scmp.eq.s32.totalorder %s22, 0
      %p183 = por %p181, %p182
      %p184 = scmp.ne.s32.totalorder %s176, %s178
      %p185 = scmp.eq.s32.totalorder %s27, 5
      %p186 = por %p184, %p185
      %p187 = scmp.ne.s32.totalorder %s178, %s179
      %p188 = scmp.eq.s32.totalorder %s27, 0
      %p189 = por %p187, %p188
      %p190 = scmp.ne.s32.totalorder %s178, %s179
      %p191 = scmp.eq.s32.totalorder %s28, 5
      %p192 = por %p190, %p191
      %p194 = scmp.ne.s32.totalorder %s179, %s193
      %p195 = scmp.eq.s32.totalorder %s28, 0
      %p196 = por %p194, %p195
      %s198 = sadd.s32 %s197, 1
      %p201 = scmp.eq.s32.totalorder %s22, 5
      %p202 = scmp.ne.s32.totalorder %s197, %s199
      %p203 = scmp.eq.s32.totalorder %s22, 0
      %p204 = por %p202, %p203
      %p205 = scmp.ne.s32.totalorder %s197, %s199
      %p206 = scmp.eq.s32.totalorder %s27, 5
      %p207 = por %p205, %p206
      %p208 = scmp.ne.s32.totalorder %s199, %s200
      %p209 = scmp.eq.s32.totalorder %s27, 0
      %p210 = por %p208, %p209
      %p211 = scmp.ne.s32.totalorder %s199, %s200
      %p212 = scmp.eq.s32.totalorder %s28, 5
      %p213 = por %p211, %p212
      %p215 = scmp.ne.s32.totalorder %s200, %s214
      %p216 = scmp.eq.s32.totalorder %s28, 0
      %p217 = por %p215, %p216
      %s218 = ssub.s32 %s29, %s41
      %s219 = ssub.s32 %s30, %s37
      %s220 = sor.u32 %s218, %s219
      %p221 = scmp.eq.s32.totalorder %s220, 0
      %s223 = sadd.s32 %s222, 1
      %s224 = scalar_select %p221, %s222, %s223
      %p227 = pneg %p221
      %p228 = scmp.eq.s32.totalorder %s22, 5
      %p229 = por %p227, %p228
      %p230 = scmp.ne.s32.totalorder %s222, %s225
      %p231 = scmp.eq.s32.totalorder %s22, 0
      %p232 = por %p230, %p231
      %p233 = scmp.ne.s32.totalorder %s222, %s225
      %p234 = scmp.eq.s32.totalorder %s27, 5
      %p235 = por %p233, %p234
      %p236 = scmp.ne.s32.totalorder %s225, %s226
      %p237 = scmp.eq.s32.totalorder %s27, 0
      %p238 = por %p236, %p237
      %p239 = scmp.ne.s32.totalorder %s225, %s226
      %p240 = scmp.eq.s32.totalorder %s28, 5
      %p241 = por %p239, %p240
      %p243 = scmp.ne.s32.totalorder %s226, %s242
      %p244 = scmp.eq.s32.totalorder %s28, 0
      %p245 = por %p243, %p244
      %p246 = scmp.le.s32.totalorder 1, %s22
      %p247 = scmp.lt.s32.totalorder %s22, 7
      %p248 = pnand %p246, %p247
      %p249 = pneg %p248
      // Predicated region
      $region9: #{tpu_custom_call.1} parent=5 // pred_check
        _
      $region10: #{tpu_custom_call.1} parent=5 // pred_check_branch
        %251 = sbr.rel (%p248) target = $region12
      $region11: #{tpu_custom_call.1} parent=5 // pred_region
        %s252 = ssub.s32 %s22, 1
        // Predicated region
        $region13: #{tpu_custom_call.1} parent=11 // pred_check
          %p253 = pneg %p147
        $region14: #{tpu_custom_call.1} parent=11 // pred_check_branch
          %255 = sbr.rel (%p253) target = $region16
        $region15: #{tpu_custom_call.1} parent=11 // pred_region
          _
        $region16: #{tpu_custom_call.1} parent=11 // pred_fallthru
          _
        // Predicated region
        $region17: #{tpu_custom_call.1} parent=11 // pred_check
          %p256 = pneg %p168
        $region18: #{tpu_custom_call.1} parent=11 // pred_check_branch
          %258 = sbr.rel (%p256) target = $region20
        $region19: #{tpu_custom_call.1} parent=11 // pred_region
          _
        $region20: #{tpu_custom_call.1} parent=11 // pred_fallthru
          _
        // Predicated region
        $region21: #{tpu_custom_call.1} parent=11 // pred_check
          %p259 = pneg %p189
        $region22: #{tpu_custom_call.1} parent=11 // pred_check_branch
          %261 = sbr.rel (%p259) target = $region24
        $region23: #{tpu_custom_call.1} parent=11 // pred_region
          _
        $region24: #{tpu_custom_call.1} parent=11 // pred_fallthru
          _
        // Predicated region
        $region25: #{tpu_custom_call.1} parent=11 // pred_check
          %p262 = pneg %p210
        $region26: #{tpu_custom_call.1} parent=11 // pred_check_branch
          %264 = sbr.rel (%p262) target = $region28
        $region27: #{tpu_custom_call.1} parent=11 // pred_region
          _
        $region28: #{tpu_custom_call.1} parent=11 // pred_fallthru
          _
      $region12: #{tpu_custom_call.1} parent=5 // pred_fallthru
        _
      %p265 = scmp.lt.s32.totalorder %s22, 6
      // Predicated region
      $region29: #{tpu_custom_call.1} parent=5 // pred_check
        %p266 = pneg %p265
      $region30: #{tpu_custom_call.1} parent=5 // pred_check_branch
        %268 = sbr.rel (%p266) target = $region32
      $region31: #{tpu_custom_call.1} parent=5 // pred_region
        // Predicated region
        $region33: #{tpu_custom_call.1} parent=31 // pred_check
          %p269 = pneg %p62
        $region34: #{tpu_custom_call.1} parent=31 // pred_check_branch
          %271 = sbr.rel (%p269) target = $region36
        $region35: #{tpu_custom_call.1} parent=31 // pred_region
          %s272 = sand.u32 %s52, 1
          %s273 = scalar_lea.sflag [#allocation3], %s272
          %s274 = sand.u32 %s52, 1
          %s275 = smul.addr %s274, 4
          %s276 = scalar_lea.vmem [#allocation2], %s275
          %s277 = ssub.s32 %s30, 1
          %p278 = scmp.gt.s32.totalorder %s277, 0
          %s279 = scalar_select %p278, %s277, 0
          %s281 = ssub.s32 64, 64
          %282 = vsyncadd %s273, %s281
          %s283 = smul.addr %s29, 4
          %s284 = sadd.s32 %s279, %s283
          %s285 = smul.addr %s284, 64
          %s286 = scalar_lea.hbm %s0, %s285
          %s288 = sshll.u32 %s276, 4
          %s289 = int_to_ptr.vmem [resolvable:$true] %s288
          %291 = dma.hbm_to_vmem [thread:$0]  %s286, 64, %s289, %s273
        $region36: #{tpu_custom_call.1} parent=31 // pred_fallthru
          _
        // Predicated region
        $region37: #{tpu_custom_call.1} parent=31 // pred_check
          %p292 = pneg %p90
        $region38: #{tpu_custom_call.1} parent=31 // pred_check_branch
          %294 = sbr.rel (%p292) target = $region40
        $region39: #{tpu_custom_call.1} parent=31 // pred_region
          %s295 = sand.u32 %s22, 1
          %s296 = scalar_lea.sflag [#allocation6], %s295
          %s297 = sand.u32 %s80, 1
          %s298 = smul.addr %s297, 4
          %s299 = scalar_lea.vmem [#allocation5], %s298
          %s301 = ssub.s32 64, 64
          %302 = vsyncadd %s296, %s301
          %s303 = smul.addr %s29, 4
          %s304 = sadd.s32 %s30, %s303
          %s305 = smul.addr %s304, 64
          %s306 = scalar_lea.hbm %s1, %s305
          %s308 = sshll.u32 %s299, 4
          %s309 = int_to_ptr.vmem [resolvable:$true] %s308
          %311 = dma.hbm_to_vmem [thread:$0]  %s306, 64, %s309, %s296
        $region40: #{tpu_custom_call.1} parent=31 // pred_fallthru
          _
        // Predicated region
        $region41: #{tpu_custom_call.1} parent=31 // pred_check
          %p312 = pneg %p120
        $region42: #{tpu_custom_call.1} parent=31 // pred_check_branch
          %314 = sbr.rel (%p312) target = $region44
        $region43: #{tpu_custom_call.1} parent=31 // pred_region
          %s315 = sand.u32 %s22, 1
          %s316 = scalar_lea.sflag [#allocation6], %s315
          %s317 = sand.u32 %s110, 1
          %s318 = smul.addr %s317, 4
          %s319 = scalar_lea.vmem [#allocation7], %s318
          %s320 = sadd.s32 %s30, 1
          %s322 = ssub.s32 64, 64
          %323 = vsyncadd %s316, %s322
          %s324 = smul.addr %s29, 4
          %s325 = sadd.s32 %s320, %s324
          %s326 = smul.addr %s325, 64
          %s327 = scalar_lea.hbm %s2, %s326
          %s329 = sshll.u32 %s319, 4
          %s330 = int_to_ptr.vmem [resolvable:$true] %s329
          %332 = dma.hbm_to_vmem [thread:$0]  %s327, 64, %s330, %s316
        $region44: #{tpu_custom_call.1} parent=31 // pred_fallthru
          _
      $region32: #{tpu_custom_call.1} parent=5 // pred_fallthru
        _
      %p333 = scmp.le.s32.totalorder 1, %s22
      %p334 = scmp.lt.s32.totalorder %s22, 7
      %p335 = pnand %p333, %p334
      %p336 = pneg %p335
      // Predicated region
      $region45: #{tpu_custom_call.1} parent=5 // pred_check
        _
      $region46: #{tpu_custom_call.1} parent=5 // pred_check_branch
        %338 = sbr.rel (%p335) target = $region48
      $region47: #{tpu_custom_call.1} parent=5 // pred_region
        %s339 = ssub.s32 %s22, 1
        %s340 = sand.u32 %s55, 1
        %s341 = scalar_lea.sflag [#allocation3], %s340
        %s342 = sand.u32 %s55, 1
        %s343 = smul.addr %s342, 4
        %s344 = scalar_lea.vmem [#allocation2], %s343
        // Predicated region
        $region49: #{tpu_custom_call.1} parent=47 // pred_check
          %p345 = pneg %p68
        $region50: #{tpu_custom_call.1} parent=47 // pred_check_branch
          %347 = sbr.rel (%p345) target = $region52
        $region51: #{tpu_custom_call.1} parent=47 // pred_region
          %348 = dma.done %s341, 64
        $region52: #{tpu_custom_call.1} parent=47 // pred_fallthru
          _
        %s349 = sand.u32 %s27, 1
        %s350 = scalar_lea.sflag [#allocation6], %s349
        %s351 = sand.u32 %s83, 1
        %s352 = smul.addr %s351, 4
        %s353 = scalar_lea.vmem [#allocation5], %s352
        // Predicated region
        $region53: #{tpu_custom_call.1} parent=47 // pred_check
          %p354 = pneg %p96
        $region54: #{tpu_custom_call.1} parent=47 // pred_check_branch
          %356 = sbr.rel (%p354) target = $region56
        $region55: #{tpu_custom_call.1} parent=47 // pred_region
          %357 = dma.done %s350, 64
        $region56: #{tpu_custom_call.1} parent=47 // pred_fallthru
          _
        %s358 = sand.u32 %s27, 1
        %s359 = scalar_lea.sflag [#allocation6], %s358
        %s360 = sand.u32 %s113, 1
        %s361 = smul.addr %s360, 4
        %s362 = scalar_lea.vmem [#allocation7], %s361
        // Predicated region
        $region57: #{tpu_custom_call.1} parent=47 // pred_check
          %p363 = pneg %p126
        $region58: #{tpu_custom_call.1} parent=47 // pred_check_branch
          %365 = sbr.rel (%p363) target = $region60
        $region59: #{tpu_custom_call.1} parent=47 // pred_region
          %366 = dma.done %s359, 64
        $region60: #{tpu_custom_call.1} parent=47 // pred_fallthru
          _
        %s367 = sand.u32 %s55, 1
        %s368 = scalar_lea.sflag [#allocation3], %s367
        %s369 = sand.u32 %s55, 1
        %s370 = smul.addr %s369, 4
        %s371 = scalar_lea.vmem [#allocation2], %s370
        %p372 = pneg %p68
        %p373 = pneg %p65
        %s374 = sand.u32 %s27, 1
        %s375 = scalar_lea.sflag [#allocation6], %s374
        %s376 = sand.u32 %s83, 1
        %s377 = smul.addr %s376, 4
        %s378 = scalar_lea.vmem [#allocation5], %s377
        %p379 = pneg %p96
        %p380 = pneg %p93
        %s381 = sand.u32 %s27, 1
        %s382 = scalar_lea.sflag [#allocation6], %s381
        %s383 = sand.u32 %s113, 1
        %s384 = smul.addr %s383, 4
        %s385 = scalar_lea.vmem [#allocation7], %s384
        %p386 = pneg %p126
        %p387 = pneg %p123
        %p388 = pneg %p147
        %p389 = pneg %p144
        %p390 = pneg %p168
        %p391 = pneg %p165
        %p392 = pneg %p189
        %p393 = pneg %p186
        %p394 = pneg %p210
        %p395 = pneg %p207
        %p396 = pneg %p238
        %p397 = pneg %p235
        %s398 = sand.u32 %s225, 1
        %s399 = scalar_lea.sflag [#allocation4], %s398
        %s400 = sand.u32 %s225, 1
        %s401 = smul.addr %s400, 8
        %s402 = scalar_lea.vmem [#allocation8], %s401
        %s403 = ssub.s32 %s32, 1
        %p404 = scmp.gt.s32.totalorder %s403, 0
        %s405 = scalar_select %p404, %s403, 0
        %s406 = sadd.s32 %s32, 1
        %s409 = smul.u32 %s32, 128
        %v410 = vld [vmem:[%s353] sm:$0xf]
        %v411 = vld [vmem:[%s344] sm:$0xf]
        %v412 = vld [vmem:[%s362] sm:$0xf]
        %p413 = scmp.gt.s32.totalorder %s32, 0
        %s414 = scalar_select %p413, 1, 0
        %v415 = vstv %s414
        %vm416 = vcmp.eq.s32.totalorder %v415, 1
        %v417 = vsel %vm416, %v411, 0
        %v419 = vunpack.c.l.b16 %v417
        %v420 = vpack.c.b16 %v419, %v419
        %421 = vrot.lane.b32.xlu0 %v420, 4
        %v422 = vpop.permute.xlu0 %421
        %v424 = vunpack.c.l.b16 %v410
        %v425 = vpack.c.b16 %v424, %v424
        %426 = vrot.lane.b32.xlu0 %v425, 4
        %v427 = vpop.permute.xlu0 %426
        %v429 = vunpack.c.l.b16 %v412
        %v430 = vpack.c.b16 %v429, %v429
        %431 = vrot.lane.b32.xlu0 %v430, 4
        %v432 = vpop.permute.xlu0 %431
        %vm433 = vcmask 31744
        %v436 = vsel %vm433, %v422, %v427
        %v439 = vsel %vm433, %v427, %v432
        %vm441 = vcmp.ge.bf16.partialorder %v436, 0
        %vm442 = vcmp.ge.bf16.partialorder %v439, 0
        %v443 = vmul.bf16 %v436, 1036860877
        %v444 = vmul.bf16 %v439, 1036860877
        %v445 = vsel %vm441, %v436, %v443
        %v446 = vsel %vm442, %v439, %v444
        %v447 = vld [vmem:[%s3] sm:$0xf]
        %s448 = scalar_lea.vmem %s3, 4
        %v449 = vld [vmem:[%s448] sm:$0xf]
        %452 = vrot.lane.b32.xlu0 %v445, 127
        %v453 = vpop.permute.xlu0 %452
        %454 = vrot.lane.b32.xlu0 %v446, 127
        %v455 = vpop.permute.xlu0 %454
        %vm456 = vcmask 1039360
        %v457 = vsel %vm456, %v453, %v455
        %vm458 = vcmask 64512
        %v460 = vsel %vm458, %v449, 0
        %vm462 = vcmask 1043456
        %v464 = vsel %vm462, %v457, 0
        %v467 = vsel %vm462, %v455, 0
        %469 = vmatprep.subr.bf16.mxu0 0
        %470 = vmatpush1.bf16.msra.mxu0 0
        %471 = vmatprep.subr.bf16.mxu0 0
        %472 = vmatpush1.bf16.msra.mxu0 0
        %473 = vmatprep.subr.bf16.mxu0 0
        %474 = vmatpush1.bf16.msra.mxu0 0
        %475 = vmatprep.subr.bf16.mxu0 0
        %476 = vmatpush1.bf16.msra.mxu0 0
        %477 = vmatprep.subr.bf16.mxu0 0
        %478 = vmatpush1.bf16.msra.mxu0 0
        %479 = vmatprep.subr.bf16.mxu0 0
        %480 = vmatpush1.bf16.msra.mxu0 0
        %481 = vmatprep.subr.bf16.mxu0 0
        %482 = vmatpush1.bf16.msra.mxu0 0
        %483 = vmatprep.subr.bf16.mxu0 %v467
        %484 = vmatpush1.bf16.msra.mxu0 %v464
        %485 = vmatprep.subr.bf16.mxu0 0
        %486 = vmatpush2.bf16.msra.mxu0 0
        %487 = vmatprep.subr.bf16.mxu0 0
        %488 = vmatpush2.bf16.msra.mxu0 0
        %489 = vmatprep.subr.bf16.mxu0 0
        %490 = vmatpush2.bf16.msra.mxu0 0
        %491 = vmatprep.subr.bf16.mxu0 0
        %492 = vmatpush2.bf16.msra.mxu0 0
        %493 = vmatprep.subr.bf16.mxu0 0
        %494 = vmatpush2.bf16.msra.mxu0 0
        %495 = vmatprep.subr.bf16.mxu0 0
        %496 = vmatpush2.bf16.msra.mxu0 0
        %497 = vmatprep.subr.bf16.mxu0 0
        %498 = vmatpush2.bf16.msra.mxu0 0
        %499 = vmatprep.subr.bf16.mxu0 0
        %500 = vmatpush2.bf16.msra.mxu0 0
        %501 = vmatprep.mubr.bf16.mxu0 0
        %502 = vmatmul.mubr.bf16.gmra.mxu0 %v460
        %v503 = vpop.f32.mrf.mxu0
        %v504 = vadd.f32 0.0, %v503
        %v505 = vpop.f32.mrf.mxu0
        %v506 = vadd.f32 0.0, %v505
        %v507 = vpop.f32.mrf.mxu0
        %v508 = vpop.f32.mrf.mxu0
        %509 = vdwg.mxu0
        %v511 = vsel %vm458, %v447, 0
        %v514 = vsel %vm462, %v445, 0
        %v517 = vsel %vm462, %v446, 0
        %519 = vmatprep.subr.bf16.mxu0 0
        %520 = vmatpush1.bf16.msra.mxu0 0
        %521 = vmatprep.subr.bf16.mxu0 0
        %522 = vmatpush1.bf16.msra.mxu0 0
        %523 = vmatprep.subr.bf16.mxu0 0
        %524 = vmatpush1.bf16.msra.mxu0 0
        %525 = vmatprep.subr.bf16.mxu0 0
        %526 = vmatpush1.bf16.msra.mxu0 0
        %527 = vmatprep.subr.bf16.mxu0 0
        %528 = vmatpush1.bf16.msra.mxu0 0
        %529 = vmatprep.subr.bf16.mxu0 0
        %530 = vmatpush1.bf16.msra.mxu0 0
        %531 = vmatprep.subr.bf16.mxu0 0
        %532 = vmatpush1.bf16.msra.mxu0 0
        %533 = vmatprep.subr.bf16.mxu0 %v517
        %534 = vmatpush1.bf16.msra.mxu0 %v514
        %535 = vmatprep.subr.bf16.mxu0 0
        %536 = vmatpush2.bf16.msra.mxu0 0
        %537 = vmatprep.subr.bf16.mxu0 0
        %538 = vmatpush2.bf16.msra.mxu0 0
        %539 = vmatprep.subr.bf16.mxu0 0
        %540 = vmatpush2.bf16.msra.mxu0 0
        %541 = vmatprep.subr.bf16.mxu0 0
        %542 = vmatpush2.bf16.msra.mxu0 0
        %543 = vmatprep.subr.bf16.mxu0 0
        %544 = vmatpush2.bf16.msra.mxu0 0
        %545 = vmatprep.subr.bf16.mxu0 0
        %546 = vmatpush2.bf16.msra.mxu0 0
        %547 = vmatprep.subr.bf16.mxu0 0
        %548 = vmatpush2.bf16.msra.mxu0 0
        %549 = vmatprep.subr.bf16.mxu0 0
        %550 = vmatpush2.bf16.msra.mxu0 0
        %551 = vmatprep.mubr.bf16.mxu0 0
        %552 = vmatmul.mubr.bf16.gmra.mxu0 %v511
        %v553 = vpop.f32.mrf.mxu0
        %v554 = vadd.f32 %v504, %v553
        %v555 = vpop.f32.mrf.mxu0
        %v556 = vadd.f32 %v506, %v555
        %v557 = vpop.f32.mrf.mxu0
        %v558 = vpop.f32.mrf.mxu0
        %559 = vdwg.mxu0
        %s560 = scalar_lea.vmem %s3, 8
        %v561 = vld [vmem:[%s560] sm:$0xf]
        %562 = vrot.lane.b32.xlu0 %v445, 126
        %v563 = vpop.permute.xlu0 %562
        %564 = vrot.lane.b32.xlu0 %v446, 126
        %v565 = vpop.permute.xlu0 %564
        %vm566 = vcmask 1031168
        %v567 = vsel %vm566, %v563, %v565
        %v569 = vsel %vm458, %v561, 0
        %v572 = vsel %vm462, %v567, 0
        %v575 = vsel %vm462, %v565, 0
        %577 = vmatprep.subr.bf16.mxu0 0
        %578 = vmatpush1.bf16.msra.mxu0 0
        %579 = vmatprep.subr.bf16.mxu0 0
        %580 = vmatpush1.bf16.msra.mxu0 0
        %581 = vmatprep.subr.bf16.mxu0 0
        %582 = vmatpush1.bf16.msra.mxu0 0
        %583 = vmatprep.subr.bf16.mxu0 0
        %584 = vmatpush1.bf16.msra.mxu0 0
        %585 = vmatprep.subr.bf16.mxu0 0
        %586 = vmatpush1.bf16.msra.mxu0 0
        %587 = vmatprep.subr.bf16.mxu0 0
        %588 = vmatpush1.bf16.msra.mxu0 0
        %589 = vmatprep.subr.bf16.mxu0 0
        %590 = vmatpush1.bf16.msra.mxu0 0
        %591 = vmatprep.subr.bf16.mxu0 %v575
        %592 = vmatpush1.bf16.msra.mxu0 %v572
        %593 = vmatprep.subr.bf16.mxu0 0
        %594 = vmatpush2.bf16.msra.mxu0 0
        %595 = vmatprep.subr.bf16.mxu0 0
        %596 = vmatpush2.bf16.msra.mxu0 0
        %597 = vmatprep.subr.bf16.mxu0 0
        %598 = vmatpush2.bf16.msra.mxu0 0
        %599 = vmatprep.subr.bf16.mxu0 0
        %600 = vmatpush2.bf16.msra.mxu0 0
        %601 = vmatprep.subr.bf16.mxu0 0
        %602 = vmatpush2.bf16.msra.mxu0 0
        %603 = vmatprep.subr.bf16.mxu0 0
        %604 = vmatpush2.bf16.msra.mxu0 0
        %605 = vmatprep.subr.bf16.mxu0 0
        %606 = vmatpush2.bf16.msra.mxu0 0
        %607 = vmatprep.subr.bf16.mxu0 0
        %608 = vmatpush2.bf16.msra.mxu0 0
        %609 = vmatprep.mubr.bf16.mxu0 0
        %610 = vmatmul.mubr.bf16.gmra.mxu0 %v569
        %v611 = vpop.f32.mrf.mxu0
        %v612 = vadd.f32 0.0, %v611
        %v613 = vpop.f32.mrf.mxu0
        %v614 = vadd.f32 0.0, %v613
        %v615 = vpop.f32.mrf.mxu0
        %v616 = vpop.f32.mrf.mxu0
        %617 = vdwg.mxu0
        %v618 = vadd.f32 %v554, %v612
        %v619 = vadd.f32 %v556, %v614
        %v620 = vunpack.c.l.bf16 %v436
        %v621 = vunpack.c.l.bf16 %v439
        %624 = vrot.lane.b32.xlu0 %v618, 1
        %v625 = vpop.permute.xlu0 %624
        %626 = vrot.lane.b32.xlu0 %v619, 1
        %v627 = vpop.permute.xlu0 %626
        %vm628 = vcmask 7168
        %v629 = vsel %vm628, %v625, %v627
        %v632 = vadd.f32 %v620, %v625
        %v633 = vadd.f32 %v621, %v629
        %v634 = vld [vmem:[%s4] sm:$0xff]
        %636 = vset.pattern.permute.xlu0 0
        %637 = vperm.xlu0 %636, %v634
        %v638 = vpop.permute.xlu0 %637
        %v640 = vadd.f32 %v632, %v638
        %v641 = vadd.f32 %v633, %v638
        %v642 = vlaneseq
        %v643 = vand.u32 %v642, 127
        %v644 = vadd.s32 %v643, 128
        %s645 = ssub.s32 %s409, 3
        %v646 = vstv %s645
        %v647 = vadd.s32 %v643, %v646
        %v648 = vadd.s32 %v644, %v646
        %vm649 = vcmp.ge.s32.totalorder %v647, 0
        %vm650 = vcmp.ge.s32.totalorder %v648, 0
        %vm651 = vcmp.lt.s32.totalorder %v647, 300
        %vm652 = vcmp.lt.s32.totalorder %v648, 300
        %vm653 = vmand %vm649, %vm651
        %vm654 = vmand %vm650, %vm652
        %v655 = vsel %vm653, 1, 0
        %v656 = vsel %vm654, 1, 0
        %vm657 = vcmp.eq.s32.totalorder %v655, 1
        %vm658 = vcmp.eq.s32.totalorder %v656, 1
        %661 = vrot.lane.b32.xlu0 %v640, 127
        %v662 = vpop.permute.xlu0 %661
        %663 = vrot.lane.b32.xlu0 %v641, 127
        %v664 = vpop.permute.xlu0 %663
        %vm665 = vcmask 1039360
        %v666 = vsel %vm665, %v662, %v664
        %v669 = vsel %vm657, %v666, 0.0
        %v670 = vsel %vm658, %v664, 0.0
        %vm671 = vcmp.ge.f32.partialorder %v669, 0.0
        %vm672 = vcmp.ge.f32.partialorder %v670, 0.0
        %v673 = vmul.f32 %v669, 0.1
        %v674 = vmul.f32 %v670, 0.1
        %v675 = vsel %vm671, %v669, %v673
        %v676 = vsel %vm672, %v670, %v674
        %v677 = vpack.c.bf16 %v675, %v675
        %v678 = vpack.c.bf16 %v676, %v676
        %v679 = vld [vmem:[%s5] sm:$0xf]
        %s680 = scalar_lea.vmem %s5, 4
        %v681 = vld [vmem:[%s680] sm:$0xf]
        %684 = vrot.lane.b32.xlu0 %v677, 125
        %v685 = vpop.permute.xlu0 %684
        %686 = vrot.lane.b32.xlu0 %v678, 125
        %v687 = vpop.permute.xlu0 %686
        %vm688 = vcmask 1022976
        %v689 = vsel %vm688, %v685, %v687
        %v691 = vsel %vm458, %v681, 0
        %v694 = vsel %vm462, %v689, 0
        %696 = vmatprep.subr.bf16.mxu0 0
        %697 = vmatpush1.bf16.msra.mxu0 0
        %698 = vmatprep.subr.bf16.mxu0 0
        %699 = vmatpush1.bf16.msra.mxu0 0
        %700 = vmatprep.subr.bf16.mxu0 0
        %701 = vmatpush1.bf16.msra.mxu0 0
        %702 = vmatprep.subr.bf16.mxu0 0
        %703 = vmatpush1.bf16.msra.mxu0 0
        %704 = vmatprep.subr.bf16.mxu0 0
        %705 = vmatpush1.bf16.msra.mxu0 0
        %706 = vmatprep.subr.bf16.mxu0 0
        %707 = vmatpush1.bf16.msra.mxu0 0
        %708 = vmatprep.subr.bf16.mxu0 0
        %709 = vmatpush1.bf16.msra.mxu0 0
        %710 = vmatprep.subr.bf16.mxu0 0
        %711 = vmatpush1.bf16.msra.mxu0 %v694
        %712 = vmatprep.subr.bf16.mxu0 0
        %713 = vmatpush2.bf16.msra.mxu0 0
        %714 = vmatprep.subr.bf16.mxu0 0
        %715 = vmatpush2.bf16.msra.mxu0 0
        %716 = vmatprep.subr.bf16.mxu0 0
        %717 = vmatpush2.bf16.msra.mxu0 0
        %718 = vmatprep.subr.bf16.mxu0 0
        %719 = vmatpush2.bf16.msra.mxu0 0
        %720 = vmatprep.subr.bf16.mxu0 0
        %721 = vmatpush2.bf16.msra.mxu0 0
        %722 = vmatprep.subr.bf16.mxu0 0
        %723 = vmatpush2.bf16.msra.mxu0 0
        %724 = vmatprep.subr.bf16.mxu0 0
        %725 = vmatpush2.bf16.msra.mxu0 0
        %726 = vmatprep.subr.bf16.mxu0 0
        %727 = vmatpush2.bf16.msra.mxu0 0
        %728 = vmatprep.mubr.bf16.mxu0 0
        %729 = vmatmul.mubr.bf16.gmra.mxu0 %v691
        %v730 = vpop.f32.mrf.mxu0
        %v731 = vadd.f32 0.0, %v730
        %v732 = vpop.f32.mrf.mxu0
        %v733 = vpop.f32.mrf.mxu0
        %v734 = vpop.f32.mrf.mxu0
        %735 = vdwg.mxu0
        %v737 = vsel %vm458, %v679, 0
        %v740 = vsel %vm462, %v677, 0
        %742 = vmatprep.subr.bf16.mxu0 0
        %743 = vmatpush1.bf16.msra.mxu0 0
        %744 = vmatprep.subr.bf16.mxu0 0
        %745 = vmatpush1.bf16.msra.mxu0 0
        %746 = vmatprep.subr.bf16.mxu0 0
        %747 = vmatpush1.bf16.msra.mxu0 0
        %748 = vmatprep.subr.bf16.mxu0 0
        %749 = vmatpush1.bf16.msra.mxu0 0
        %750 = vmatprep.subr.bf16.mxu0 0
        %751 = vmatpush1.bf16.msra.mxu0 0
        %752 = vmatprep.subr.bf16.mxu0 0
        %753 = vmatpush1.bf16.msra.mxu0 0
        %754 = vmatprep.subr.bf16.mxu0 0
        %755 = vmatpush1.bf16.msra.mxu0 0
        %756 = vmatprep.subr.bf16.mxu0 0
        %757 = vmatpush1.bf16.msra.mxu0 %v740
        %758 = vmatprep.subr.bf16.mxu0 0
        %759 = vmatpush2.bf16.msra.mxu0 0
        %760 = vmatprep.subr.bf16.mxu0 0
        %761 = vmatpush2.bf16.msra.mxu0 0
        %762 = vmatprep.subr.bf16.mxu0 0
        %763 = vmatpush2.bf16.msra.mxu0 0
        %764 = vmatprep.subr.bf16.mxu0 0
        %765 = vmatpush2.bf16.msra.mxu0 0
        %766 = vmatprep.subr.bf16.mxu0 0
        %767 = vmatpush2.bf16.msra.mxu0 0
        %768 = vmatprep.subr.bf16.mxu0 0
        %769 = vmatpush2.bf16.msra.mxu0 0
        %770 = vmatprep.subr.bf16.mxu0 0
        %771 = vmatpush2.bf16.msra.mxu0 0
        %772 = vmatprep.subr.bf16.mxu0 0
        %773 = vmatpush2.bf16.msra.mxu0 0
        %774 = vmatprep.mubr.bf16.mxu0 0
        %775 = vmatmul.mubr.bf16.gmra.mxu0 %v737
        %v776 = vpop.f32.mrf.mxu0
        %v777 = vadd.f32 %v731, %v776
        %v778 = vpop.f32.mrf.mxu0
        %v779 = vpop.f32.mrf.mxu0
        %v780 = vpop.f32.mrf.mxu0
        %781 = vdwg.mxu0
        %s782 = scalar_lea.vmem %s5, 8
        %v783 = vld [vmem:[%s782] sm:$0xf]
        %784 = vrot.lane.b32.xlu0 %v677, 122
        %v785 = vpop.permute.xlu0 %784
        %786 = vrot.lane.b32.xlu0 %v678, 122
        %v787 = vpop.permute.xlu0 %786
        %vm788 = vcmask 998400
        %v789 = vsel %vm788, %v785, %v787
        %v791 = vsel %vm458, %v783, 0
        %v794 = vsel %vm462, %v789, 0
        %796 = vmatprep.subr.bf16.mxu0 0
        %797 = vmatpush1.bf16.msra.mxu0 0
        %798 = vmatprep.subr.bf16.mxu0 0
        %799 = vmatpush1.bf16.msra.mxu0 0
        %800 = vmatprep.subr.bf16.mxu0 0
        %801 = vmatpush1.bf16.msra.mxu0 0
        %802 = vmatprep.subr.bf16.mxu0 0
        %803 = vmatpush1.bf16.msra.mxu0 0
        %804 = vmatprep.subr.bf16.mxu0 0
        %805 = vmatpush1.bf16.msra.mxu0 0
        %806 = vmatprep.subr.bf16.mxu0 0
        %807 = vmatpush1.bf16.msra.mxu0 0
        %808 = vmatprep.subr.bf16.mxu0 0
        %809 = vmatpush1.bf16.msra.mxu0 0
        %810 = vmatprep.subr.bf16.mxu0 0
        %811 = vmatpush1.bf16.msra.mxu0 %v794
        %812 = vmatprep.subr.bf16.mxu0 0
        %813 = vmatpush2.bf16.msra.mxu0 0
        %814 = vmatprep.subr.bf16.mxu0 0
        %815 = vmatpush2.bf16.msra.mxu0 0
        %816 = vmatprep.subr.bf16.mxu0 0
        %817 = vmatpush2.bf16.msra.mxu0 0
        %818 = vmatprep.subr.bf16.mxu0 0
        %819 = vmatpush2.bf16.msra.mxu0 0
        %820 = vmatprep.subr.bf16.mxu0 0
        %821 = vmatpush2.bf16.msra.mxu0 0
        %822 = vmatprep.subr.bf16.mxu0 0
        %823 = vmatpush2.bf16.msra.mxu0 0
        %824 = vmatprep.subr.bf16.mxu0 0
        %825 = vmatpush2.bf16.msra.mxu0 0
        %826 = vmatprep.subr.bf16.mxu0 0
        %827 = vmatpush2.bf16.msra.mxu0 0
        %828 = vmatprep.mubr.bf16.mxu0 0
        %829 = vmatmul.mubr.bf16.gmra.mxu0 %v791
        %v830 = vpop.f32.mrf.mxu0
        %v831 = vadd.f32 0.0, %v830
        %v832 = vpop.f32.mrf.mxu0
        %v833 = vpop.f32.mrf.mxu0
        %v834 = vpop.f32.mrf.mxu0
        %835 = vdwg.mxu0
        %v836 = vadd.f32 %v777, %v831
        %838 = vrot.lane.b32.xlu0 %v836, 3
        %v839 = vpop.permute.xlu0 %838
        %v841 = vadd.f32 %v669, %v839
        %v842 = vadd.f32 %v670, %v839
        %v843 = vld [vmem:[%s6] sm:$0xff]
        %845 = vset.pattern.permute.xlu0 0
        %846 = vperm.xlu0 %845, %v843
        %v847 = vpop.permute.xlu0 %846
        %v849 = vadd.f32 %v841, %v847
        %v850 = vadd.f32 %v842, %v847
        %853 = vrot.lane.b32.xlu0 %v849, 125
        %v854 = vpop.permute.xlu0 %853
        %855 = vrot.lane.b32.xlu0 %v850, 125
        %v856 = vpop.permute.xlu0 %855
        %vm857 = vcmask 1022976
        %v858 = vsel %vm857, %v854, %v856
        %860 = vst [vmem:[%s402] sm:$0xff] %v858
        %s861 = sand.u32 %s225, 1
        %s862 = scalar_lea.sflag [#allocation4], %s861
        %s863 = sand.u32 %s225, 1
        %s864 = smul.addr %s863, 8
        %s865 = scalar_lea.vmem [#allocation8], %s864
        // Predicated region
        $region61: #{tpu_custom_call.1} parent=47 // pred_check
          %p866 = pneg %p235
        $region62: #{tpu_custom_call.1} parent=47 // pred_check_branch
          %868 = sbr.rel (%p866) target = $region64
        $region63: #{tpu_custom_call.1} parent=47 // pred_region
          %s870 = ssub.s32 128, 128
          %871 = vsyncadd %s862, %s870
          %s872 = smul.addr %s31, 3
          %s873 = sadd.s32 %s32, %s872
          %s874 = smul.addr %s873, 128
          %s875 = scalar_lea.hbm %s7, %s874
          %s877 = sshll.u32 %s865, 4
          %s878 = int_to_ptr.vmem [resolvable:$true] %s877
          %880 = dma.vmem_to_hbm [thread:$0]  %s878, 128, %s875, %s862
        $region64: #{tpu_custom_call.1} parent=47 // pred_fallthru
          _
      $region48: #{tpu_custom_call.1} parent=5 // pred_fallthru
        _
      %p881 = scmp.le.s32.totalorder 2, %s22
      // Predicated region
      $region65: #{tpu_custom_call.1} parent=5 // pred_check
        %p882 = pneg %p881
      $region66: #{tpu_custom_call.1} parent=5 // pred_check_branch
        %884 = sbr.rel (%p882) target = $region68
      $region67: #{tpu_custom_call.1} parent=5 // pred_region
        %s885 = ssub.s32 %s22, 2
        // Predicated region
        $region69: #{tpu_custom_call.1} parent=67 // pred_check
          %p886 = pneg %p241
        $region70: #{tpu_custom_call.1} parent=67 // pred_check_branch
          %888 = sbr.rel (%p886) target = $region72
        $region71: #{tpu_custom_call.1} parent=67 // pred_region
          %s889 = sand.u32 %s226, 1
          %s890 = scalar_lea.sflag [#allocation4], %s889
          %s891 = sand.u32 %s226, 1
          %s892 = smul.addr %s891, 8
          %s893 = scalar_lea.vmem [#allocation8], %s892
          %894 = dma.done %s890, 128
        $region72: #{tpu_custom_call.1} parent=67 // pred_fallthru
          _
      $region68: #{tpu_custom_call.1} parent=5 // pred_fallthru
        _
    $region6: #{tpu_custom_call.1} parent=1 // loop_footer
      %s26 = sadd.s32 1, %s22
    $region7: #{tpu_custom_call.1} parent=1 // loop_footer_branch
      %21 = sbr.rel target = $region3
    $region8: #{tpu_custom_call.1} parent=1 // loop_exit
      _
    %895 = vsyncpa [#allocation3], 1
    %s896 = scalar_lea.sflag [#allocation3], 1
    %897 = vsyncpa %s896, 1
    %898 = vsyncpa [#allocation6], 1
    %s899 = scalar_lea.sflag [#allocation6], 1
    %900 = vsyncpa %s899, 1
    %901 = vsyncpa [#allocation4], 1
    %s902 = scalar_lea.sflag [#allocation4], 1
    %903 = vsyncpa %s902, 1

</llo_original>
